<compile_context>
chip_gen: v7x
topology: tpu7x:2x2x1
jax: 0.10.0
libtpu: 0.0.40
codegen_flags: <defaults>
</compile_context>

<pallas_src>
import functools

import jax
import jax.numpy as jnp
from jax.experimental import pallas as pl
from jax.experimental.pallas import tpu as pltpu


_LANE = 128
_NEG_BIG = -1e30   # bias for padded logit columns: exp(-1e30 - m) underflows to 0


def _round_up(x, m):
    return (x + m - 1) // m * m


def _vmem_capacity_bytes():
    """Per-core VMEM capacity (128 MiB v5e/v6e, 64 MiB v7x), with a safe fallback."""
    try:
        info = pltpu.get_tpu_info()
        for name in ("vmem_capacity_bytes", "vmem_size_bytes", "vmem_bytes"):
            v = getattr(info, name, None)
            if v:
                return int(v)
    except Exception:
        pass
    return 64 << 20   # conservative: fits every generation


def _vmem_space():
    ms = getattr(pltpu, "MemorySpace", None)
    if ms is not None and hasattr(ms, "VMEM"):
        return ms.VMEM
    return pltpu.VMEM   # older alias


# ---------------------------------------------------------------------------
# Fused kernel: every linear layer + classification head for one batch tile.
# ---------------------------------------------------------------------------
def _mlp_cls_kernel(x_ref, *refs, num_layers, activation, binary, c_out):
    param_refs = refs[: 2 * num_layers]
    prob_ref = refs[2 * num_layers]

    h = x_ref[...]
    for i in range(num_layers):
        w = param_refs[2 * i][...]
        b = param_refs[2 * i + 1][...]
        h = jnp.dot(h.astype(w.dtype), w, preferred_element_type=jnp.float32)
        h = h + b                                  # (1, out) broadcasts over rows, f32
        if i < num_layers - 1:
            if activation == "relu":
                h = jnp.maximum(h, 0.0)
            elif activation == "logistic":
                h = jax.nn.sigmoid(h)
            elif activation == "tanh":
                h = jnp.tanh(h)
            # "identity": nothing

    logits = h                                     # (TM, c_pad) f32, lane-aligned
    if binary:
        # Columns 0 and 1 of the padded last layer both hold the single real
        # logit, so [1 - p, p] needs no cross-lane shuffle.
        p2 = jax.nn.sigmoid(logits[:, :2])
        cols = jax.lax.broadcasted_iota(jnp.int32, p2.shape, 1)
        prob_ref[...] = jnp.where(cols == 0, 1.0 - p2, p2).astype(prob_ref.dtype)
    else:
        # Padded logit columns carry a -1e30 bias -> their exp underflows to 0,
        # so the softmax needs no explicit lane mask.
        m = jnp.max(logits, axis=-1, keepdims=True)
        e = jnp.exp(logits - m)
        denom = jnp.sum(e, axis=-1, keepdims=True)
        prob = e * pl.reciprocal(denom, approx=True)      # EUP slot, ~free
        prob_ref[...] = prob[:, :c_out].astype(prob_ref.dtype)


# ---------------------------------------------------------------------------
# Model wrapper (mirrors MLPClassificationModel.forward)
# ---------------------------------------------------------------------------
class MLPClassificationPallas:
    def __init__(self, weights, biases, activation, classes, *,
                 compute_dtype=jnp.float32, max_block_rows=1024,
                 vmem_budget_bytes=None, vmem_limit_bytes=None):
        assert len(weights) == len(biases) >= 1
        if activation not in ("relu", "logistic", "tanh", "identity"):
            raise RuntimeError("Unsupported activation {0}".format(activation))
        self.activation = activation
        self.classes = jnp.asarray(classes, jnp.int32)
        cls = list(classes)
        self.num_classes = len(cls)
        self.perform_class_select = (min(cls) != 0) or (max(cls) != len(cls) - 1)
        self.binary = len(cls) == 2
        self.max_block_rows = int(max_block_rows)
        self.compute_dtype = jnp.dtype(compute_dtype)

        cap = _vmem_capacity_bytes()
        # ~70% of per-core VMEM for tile sizing (~90 MiB v5e/v6e, ~45 MiB v7x);
        # ~80% as the explicit scoped-VMEM limit handed to the compiler.
        self.vmem_budget_bytes = int(vmem_budget_bytes) if vmem_budget_bytes else int(cap * 0.70)
        self.vmem_limit_bytes = int(vmem_limit_bytes) if vmem_limit_bytes else int(cap * 0.80)

        ws = [jnp.asarray(w, jnp.float32) for w in weights]
        bs = [jnp.asarray(b, jnp.float32).reshape(1, -1) for b in biases]
        num_layers = len(ws)

        out_dim = ws[-1].shape[1]
        if self.binary:
            assert out_dim == 1, "binary classification expects 1 output logit"
            self.c_out = 2
        else:
            assert out_dim == self.num_classes
            self.c_out = self.num_classes

        # Zero-pad every layer's output width (and the matching next-layer input
        # rows) to a multiple of 128 lanes.  Padded activation columns always
        # multiply zero weight rows, so the math is unchanged.  Feature dim F is
        # NOT padded (would require copying x in the wrapper).
        padded_ws, padded_bs = [], []
        k_pad = ws[0].shape[0]
        for i, (w, b) in enumerate(zip(ws, bs)):
            k, n = w.shape
            n_pad = _round_up(n, _LANE)
            w_new = jnp.zeros((k_pad, n_pad), self.compute_dtype)
            w_new = w_new.at[:k, :n].set(w.astype(self.compute_dtype))
            b_new = jnp.zeros((1, n_pad), jnp.float32)
            b_new = b_new.at[:, :n].set(b)
            if i == num_layers - 1:
                if self.binary:
                    # Duplicate the single real output column into lane 1.
                    w_new = w_new.at[:k, 1].set(w[:, 0].astype(self.compute_dtype))
                    b_new = b_new.at[0, 1].set(b[0, 0])
                elif n_pad > n:
                    # Huge-negative bias on padded classes -> softmax weight 0.
                    b_new = b_new.at[:, n:].set(_NEG_BIG)
            padded_ws.append(w_new)
            padded_bs.append(b_new)
            k_pad = n_pad

        self.weights = padded_ws
        self.biases = padded_bs
        self.c_pad = padded_ws[-1].shape[1]

    def _choose_block_rows(self, n, f, x_itemsize):
        """Largest 8-aligned batch tile that fits the VMEM budget (params counted once)."""
        param_bytes = sum(int(w.size) * w.dtype.itemsize for w in self.weights)
        param_bytes += sum(int(b.size) * b.dtype.itemsize for b in self.biases)
        max_width = max([f] + [w.shape[1] for w in self.weights])
        # Per batch row: double-buffered x tile + double-buffered prob tile
        # + headroom for live f32 activations / temporaries.
        per_row = 2 * f * x_itemsize + 2 * self.c_out * 4 + 3 * max_width * 4
        avail = self.vmem_budget_bytes - param_bytes
        tm = avail // per_row if avail > 0 else 8
        tm = max(8, int(tm) // 8 * 8)
        tm = min(tm, self.max_block_rows)
        n8 = _round_up(n, 8)
        tm = min(tm, n8)
        # Keep >= 2 batch tiles for mid/large batches so the "parallel" grid axis
        # can feed both v7x TensorCores and overlap DMA with compute.
        half = (n8 // 2) // 8 * 8
        if half >= 128:
            tm = min(tm, half)
        return max(8, tm)

    def __call__(self, x):
        x = jnp.asarray(x)
        assert x.ndim == 2
        if x.dtype not in (jnp.float32, jnp.bfloat16):
            x = x.astype(jnp.float32)
        n, f = x.shape
        tm = self._choose_block_rows(n, f, x.dtype.itemsize)
        num_tiles = pl.cdiv(n, tm)            # no jnp.pad copy of x; ragged tail OK
        num_layers = len(self.weights)

        vmem = _vmem_space()
        in_specs = [pl.BlockSpec((tm, f), lambda i: (i, 0))]
        args = [x]
        for w, b in zip(self.weights, self.biases):
            # Whole-array VMEM residents: copied once, single-buffered, shared
            # across all batch tiles.
            in_specs.append(pl.BlockSpec(memory_space=vmem))
            in_specs.append(pl.BlockSpec(memory_space=vmem))
            args.append(w)
            args.append(b)

        kernel = functools.partial(
            _mlp_cls_kernel,
            num_layers=num_layers,
            activation=self.activation,
            binary=self.binary,
            c_out=self.c_out,
        )

        prob = pl.pallas_call(
            kernel,
            out_shape=jax.ShapeDtypeStruct((n, self.c_out), jnp.float32),
            grid=(num_tiles,),
            in_specs=in_specs,
            out_specs=pl.BlockSpec((tm, self.c_out), lambda i: (i, 0)),
            compiler_params=pltpu.CompilerParams(
                dimension_semantics=("parallel",),
                vmem_limit_bytes=self.vmem_limit_bytes,
            ),
        )(*args)

        # Tiny (N, C) argmax in plain JAX (matches torch tie rule); avoids a
        # second HBM output stream from the kernel.
        idx = jnp.argmax(prob, axis=1).astype(jnp.int32)
        if self.perform_class_select:
            return jnp.take(self.classes, idx, axis=0), prob
        return idx, prob


# ---------------------------------------------------------------------------
# Plain-JAX reference (mirrors the torch module; for correctness checking)
# ---------------------------------------------------------------------------
def reference_forward(x, weights, biases, activation, classes):
    h = jnp.asarray(x, jnp.float32)
    ws = [jnp.asarray(w, jnp.float32) for w in weights]
    bs = [jnp.asarray(b, jnp.float32) for b in biases]
    for i in range(len(ws) - 1):
        h = h @ ws[i] + bs[i]
        if activation == "relu":
            h = jnp.maximum(h, 0.0)
        elif activation == "logistic":
            h = jax.nn.sigmoid(h)
        elif activation == "tanh":
            h = jnp.tanh(h)
    h = h @ ws[-1] + bs[-1]
    cls = list(classes)
    if len(cls) == 2:
        s = jax.nn.sigmoid(h)
        prob = jnp.concatenate([1.0 - s, s], axis=1)
    else:
        prob = jax.nn.softmax(h, axis=1)
    idx = jnp.argmax(prob, axis=1).astype(jnp.int32)
    if min(cls) != 0 or max(cls) != len(cls) - 1:
        return jnp.take(jnp.asarray(cls, jnp.int32), idx, axis=0), prob
    return idx, prob


if __name__ == "__main__":
    key = jax.random.PRNGKey(0)
    ks = jax.random.split(key, 16)

    # ----- multiclass model (3 classes, non-trivial labels -> class select) ----
    N, F, H, C = 8, 16, 32, 3
    x = jax.random.normal(ks[0], (N, F), dtype=jnp.float32)
    classes_mc = [3, 5, 7]
    weights_mc = [
        0.5 * jax.random.normal(ks[1], (F, H), dtype=jnp.float32),
        0.5 * jax.random.normal(ks[2], (H, H), dtype=jnp.float32),
        0.5 * jax.random.normal(ks[3], (H, C), dtype=jnp.float32),
    ]
    biases_mc = [
        0.1 * jax.random.normal(ks[4], (H,), dtype=jnp.float32),
        0.1 * jax.random.normal(ks[5], (H,), dtype=jnp.float32),
        0.1 * jax.random.normal(ks[6], (C,), dtype=jnp.float32),
    ]
    model_mc = MLPClassificationPallas(weights_mc, biases_mc, "relu", classes_mc)
    labels, probs = jax.block_until_ready(model_mc(x))
    ref_labels, ref_probs = reference_forward(x, weights_mc, biases_mc, "relu", classes_mc)
    assert probs.shape == (N, C) and labels.shape == (N,)
    assert jnp.allclose(probs, ref_probs, atol=2e-3, rtol=2e-3)   # approx-recip softmax
    assert jnp.array_equal(labels, ref_labels)

    # ----- binary model (sigmoid / [1-p, p] head) -------------------------------
    classes_bin = [0, 1]
    weights_bin = [
        0.5 * jax.random.normal(ks[7], (F, H), dtype=jnp.float32),
        0.5 * jax.random.normal(ks[8], (H, 1), dtype=jnp.float32),
    ]
    biases_bin = [
        0.1 * jax.random.normal(ks[9], (H,), dtype=jnp.float32),
        jnp.zeros((1,), dtype=jnp.float32),
    ]
    model_bin = MLPClassificationPallas(weights_bin, biases_bin, "tanh", classes_bin)
    labels_b, probs_b = jax.block_until_ready(model_bin(x))
    ref_labels_b, ref_probs_b = reference_forward(x, weights_bin, biases_bin, "tanh", classes_bin)
    assert probs_b.shape == (N, 2) and labels_b.shape == (N,)
    assert jnp.allclose(probs_b, ref_probs_b, atol=1e-5, rtol=1e-5)
    assert jnp.array_equal(labels_b, ref_labels_b)

    # ----- multi-tile / ragged-grid multiclass (grid > 1, OOB last tile) --------
    N2, F2, C2 = 300, 64, 5
    x2 = jax.random.normal(ks[10], (N2, F2), dtype=jnp.float32)
    classes_big = list(range(C2))                   # trivial labels -> plain argmax
    weights_big = [
        0.3 * jax.random.normal(ks[11], (F2, 48), dtype=jnp.float32),
        0.3 * jax.random.normal(ks[12], (48, 40), dtype=jnp.float32),
        0.3 * jax.random.normal(ks[13], (40, C2), dtype=jnp.float32),
    ]
    biases_big = [
        0.1 * jax.random.normal(ks[14], (48,), dtype=jnp.float32),
        0.1 * jax.random.normal(ks[15], (40,), dtype=jnp.float32),
        jnp.zeros((C2,), dtype=jnp.float32),
    ]
    model_big = MLPClassificationPallas(weights_big, biases_big, "logistic",
                                        classes_big, max_block_rows=128)
    labels2, probs2 = jax.block_until_ready(model_big(x2))
    ref_labels2, ref_probs2 = reference_forward(x2, weights_big, biases_big,
                                                "logistic", classes_big)
    assert probs2.shape == (N2, C2) and labels2.shape == (N2,)
    assert jnp.allclose(probs2, ref_probs2, atol=2e-3, rtol=2e-3)
    assert jnp.array_equal(labels2, ref_labels2)

    # ----- bf16-weights path (relaxed tolerance; argmax not compared) -----------
    model_bf16 = MLPClassificationPallas(weights_mc, biases_mc, "relu", classes_mc,
                                         compute_dtype=jnp.bfloat16)
    labels_h, probs_h = jax.block_until_ready(model_bf16(x))
    assert probs_h.shape == (N, C) and labels_h.shape == (N,)
    assert jnp.allclose(probs_h, ref_probs, atol=8e-2)

    print("KERNEL_OK")
</pallas_src>

<mosaic_0001>
module attributes {stable_mosaic.version = 11 : i64} {
  func.func @_mlp_cls_kernel(%arg0: i32, %arg1: memref<8x16xf32, #tpu.memory_space<vmem>>, %arg2: memref<16x128xf32, #tpu.memory_space<vmem>>, %arg3: memref<1x128xf32, #tpu.memory_space<vmem>>, %arg4: memref<128x128xf32, #tpu.memory_space<vmem>>, %arg5: memref<1x128xf32, #tpu.memory_space<vmem>>, %arg6: memref<128x128xf32, #tpu.memory_space<vmem>>, %arg7: memref<1x128xf32, #tpu.memory_space<vmem>>, %arg8: memref<8x3xf32, #tpu.memory_space<vmem>>) attributes {dimension_semantics = [#tpu.dimension_semantics<parallel>], iteration_bounds = array<i64: 1>, scalar_prefetch = 0 : i64, scratch_operands = 0 : i64, tpu.core_type = #tpu.core_type<tc>, window_params = [{transform_indices = @transform_0, window_bounds = array<i64: 8, 16>}, {pipeline_mode = #tpu.pipeline_mode<synchronous>, transform_indices = @transform_1, window_bounds = array<i64: 16, 128>}, {pipeline_mode = #tpu.pipeline_mode<synchronous>, transform_indices = @transform_2, window_bounds = array<i64: 1, 128>}, {pipeline_mode = #tpu.pipeline_mode<synchronous>, transform_indices = @transform_3, window_bounds = array<i64: 128, 128>}, {pipeline_mode = #tpu.pipeline_mode<synchronous>, transform_indices = @transform_4, window_bounds = array<i64: 1, 128>}, {pipeline_mode = #tpu.pipeline_mode<synchronous>, transform_indices = @transform_5, window_bounds = array<i64: 128, 128>}, {pipeline_mode = #tpu.pipeline_mode<synchronous>, transform_indices = @transform_6, window_bounds = array<i64: 1, 128>}, {transform_indices = @transform_7, window_bounds = array<i64: 8, 3>}]} {
    %c0 = arith.constant 0 : index
    %c0_0 = arith.constant 0 : index
    %0 = vector.load %arg1[%c0, %c0_0] : memref<8x16xf32, #tpu.memory_space<vmem>>, vector<8x16xf32>
    %c0_1 = arith.constant 0 : index
    %c0_2 = arith.constant 0 : index
    %1 = vector.load %arg2[%c0_1, %c0_2] : memref<16x128xf32, #tpu.memory_space<vmem>>, vector<16x128xf32>
    %c0_3 = arith.constant 0 : index
    %c0_4 = arith.constant 0 : index
    %2 = vector.load %arg3[%c0_3, %c0_4] : memref<1x128xf32, #tpu.memory_space<vmem>>, vector<1x128xf32>
    %cst = arith.constant dense<0.000000e+00> : vector<8x128xf32>
    %3 = tpu.matmul %0, %1, %cst {dimension_numbers = #tpu.dot_dimension_numbers<[1], [0], [0], [1], [0, 0, 1, 1], [], []>} : vector<8x16xf32>, vector<16x128xf32>, vector<8x128xf32> -> vector<8x128xf32>
    %4 = vector.broadcast %2 : vector<1x128xf32> to vector<8x128xf32>
    %5 = arith.addf %3, %4 : vector<8x128xf32>
    %cst_5 = arith.constant 0.000000e+00 : f32
    %6 = vector.broadcast %cst_5 : f32 to vector<8x128xf32>
    %7 = arith.maximumf %5, %6 : vector<8x128xf32>
    %c0_6 = arith.constant 0 : index
    %c0_7 = arith.constant 0 : index
    %8 = vector.load %arg4[%c0_6, %c0_7] : memref<128x128xf32, #tpu.memory_space<vmem>>, vector<128x128xf32>
    %c0_8 = arith.constant 0 : index
    %c0_9 = arith.constant 0 : index
    %9 = vector.load %arg5[%c0_8, %c0_9] : memref<1x128xf32, #tpu.memory_space<vmem>>, vector<1x128xf32>
    %cst_10 = arith.constant dense<0.000000e+00> : vector<8x128xf32>
    %10 = tpu.matmul %7, %8, %cst_10 {dimension_numbers = #tpu.dot_dimension_numbers<[1], [0], [0], [1], [0, 0, 1, 1], [], []>} : vector<8x128xf32>, vector<128x128xf32>, vector<8x128xf32> -> vector<8x128xf32>
    %11 = vector.broadcast %9 : vector<1x128xf32> to vector<8x128xf32>
    %12 = arith.addf %10, %11 : vector<8x128xf32>
    %cst_11 = arith.constant 0.000000e+00 : f32
    %13 = vector.broadcast %cst_11 : f32 to vector<8x128xf32>
    %14 = arith.maximumf %12, %13 : vector<8x128xf32>
    %c0_12 = arith.constant 0 : index
    %c0_13 = arith.constant 0 : index
    %15 = vector.load %arg6[%c0_12, %c0_13] : memref<128x128xf32, #tpu.memory_space<vmem>>, vector<128x128xf32>
    %c0_14 = arith.constant 0 : index
    %c0_15 = arith.constant 0 : index
    %16 = vector.load %arg7[%c0_14, %c0_15] : memref<1x128xf32, #tpu.memory_space<vmem>>, vector<1x128xf32>
    %cst_16 = arith.constant dense<0.000000e+00> : vector<8x128xf32>
    %17 = tpu.matmul %14, %15, %cst_16 {dimension_numbers = #tpu.dot_dimension_numbers<[1], [0], [0], [1], [0, 0, 1, 1], [], []>} : vector<8x128xf32>, vector<128x128xf32>, vector<8x128xf32> -> vector<8x128xf32>
    %18 = vector.broadcast %16 : vector<1x128xf32> to vector<8x128xf32>
    %19 = arith.addf %17, %18 : vector<8x128xf32>
    %cst_17 = arith.constant dense<0xFF800000> : vector<8xf32>
    %20 = vector.multi_reduction <maximumf>, %19, %cst_17 [1] : vector<8x128xf32> to vector<8xf32>
    %21 = vector.shape_cast %20 : vector<8xf32> to vector<8x1xf32>
    %22 = vector.broadcast %21 : vector<8x1xf32> to vector<8x128xf32>
    %23 = arith.subf %19, %22 : vector<8x128xf32>
    %24 = math.exp %23 : vector<8x128xf32>
    %cst_18 = arith.constant dense<0.000000e+00> : vector<8xf32>
    %25 = vector.multi_reduction <add>, %24, %cst_18 [1] : vector<8x128xf32> to vector<8xf32>
    %26 = vector.shape_cast %25 : vector<8xf32> to vector<8x1xf32>
    %27 = tpu.reciprocal %26 {approx = true} : vector<8x1xf32> -> vector<8x1xf32>
    %28 = vector.broadcast %27 : vector<8x1xf32> to vector<8x128xf32>
    %29 = arith.mulf %24, %28 : vector<8x128xf32>
    %30 = vector.extract_strided_slice %29 {offsets = [0, 0], sizes = [8, 3], strides = [1, 1]} : vector<8x128xf32> to vector<8x3xf32>
    %c0_19 = arith.constant 0 : index
    %c0_20 = arith.constant 0 : index
    %31 = vector.load %arg8[%c0_19, %c0_20] : memref<8x3xf32, #tpu.memory_space<vmem>>, vector<8x3xf32>
    tpu.vector_store %arg8[%c0_19, %c0_20], %30 {strides = array<i32>} : memref<8x3xf32, #tpu.memory_space<vmem>>, vector<8x3xf32>,
    return
  }
  func.func @transform_0(%arg0: i32) -> (i32, i32) {
    %c0_i32 = arith.constant 0 : i32
    %c0_i32_0 = arith.constant 0 : i32
    return %arg0, %c0_i32 : i32, i32
  }
  func.func @transform_1(%arg0: i32) -> (i32, i32) {
    %c0_i32 = arith.constant 0 : i32
    %c0_i32_0 = arith.constant 0 : i32
    %c0_i32_1 = arith.constant 0 : i32
    return %c0_i32, %c0_i32_0 : i32, i32
  }
  func.func @transform_2(%arg0: i32) -> (i32, i32) {
    %c0_i32 = arith.constant 0 : i32
    %c0_i32_0 = arith.constant 0 : i32
    %c0_i32_1 = arith.constant 0 : i32
    return %c0_i32, %c0_i32_0 : i32, i32
  }
  func.func @transform_3(%arg0: i32) -> (i32, i32) {
    %c0_i32 = arith.constant 0 : i32
    %c0_i32_0 = arith.constant 0 : i32
    %c0_i32_1 = arith.constant 0 : i32
    return %c0_i32, %c0_i32_0 : i32, i32
  }
  func.func @transform_4(%arg0: i32) -> (i32, i32) {
    %c0_i32 = arith.constant 0 : i32
    %c0_i32_0 = arith.constant 0 : i32
    %c0_i32_1 = arith.constant 0 : i32
    return %c0_i32, %c0_i32_0 : i32, i32
  }
  func.func @transform_5(%arg0: i32) -> (i32, i32) {
    %c0_i32 = arith.constant 0 : i32
    %c0_i32_0 = arith.constant 0 : i32
    %c0_i32_1 = arith.constant 0 : i32
    return %c0_i32, %c0_i32_0 : i32, i32
  }
  func.func @transform_6(%arg0: i32) -> (i32, i32) {
    %c0_i32 = arith.constant 0 : i32
    %c0_i32_0 = arith.constant 0 : i32
    %c0_i32_1 = arith.constant 0 : i32
    return %c0_i32, %c0_i32_0 : i32, i32
  }
  func.func @transform_7(%arg0: i32) -> (i32, i32) {
    %c0_i32 = arith.constant 0 : i32
    %c0_i32_0 = arith.constant 0 : i32
    return %arg0, %c0_i32 : i32, i32
  }
}

</mosaic_0001>

<llo_original>
// kernel: tpu_custom_call.1
$region0: #{tpu_custom_call.1}
  #allocation0 [shape = 'u32[]', space=smem, size = 0x4, offset = 0x4, fixed_abs, tag = 'smem constant byte address 0x4 - core index']
  #allocation1 [shape = 'u32[144,128]{1,0:T(1,128)}', space=vmem, size = 0x12000, scoped, tag = 'internal scratch']
  %s0 = inlined_call_operand.hbm [shape: f32[8,16], index: 0, kind: input, shape index: {}]
  %s1 = inlined_call_operand.hbm [shape: f32[16,128], index: 1, kind: input, shape index: {}]
  %s2 = inlined_call_operand.vmem [shape: f32[1,128], index: 2, kind: input, shape index: {}]
  %s3 = inlined_call_operand.hbm [shape: f32[128,128], index: 3, kind: input, shape index: {}]
  %s4 = inlined_call_operand.vmem [shape: f32[1,128], index: 4, kind: input, shape index: {}]
  %s5 = inlined_call_operand.hbm [shape: f32[128,128], index: 5, kind: input, shape index: {}]
  %s6 = inlined_call_operand.vmem [shape: f32[1,128], index: 6, kind: input, shape index: {}]
  %s7 = inlined_call_operand.vmem [shape: f32[8,3], index: 7, kind: output, shape index: {}]
  %s8 = sld [smem:[#allocation0]]
  $region54: #{tpu_custom_call.1} parent=0
    _
  %s10 = ssub.s32 1, %s8
  %s11 = scalar_select 0, %s10, %s8
  $region1: #{tpu_custom_call.1} parent=0
    #allocation2 [shape = 'u8[4096]{0}', space=vmem, size = 0x1000, scoped, tag = 'input window, operand 0, single buffered']
    #allocation3 [shape = 's32[1]{0}', space=sflag, size = 0x4, scoped, tag = 'scoped memory for tpu_custom_call.1']
    #allocation4 [shape = 'u8[8192]{0}', space=vmem, size = 0x2000, scoped, tag = 'input window, operand 1, single buffered']
    #allocation5 [shape = 's32[1]{0}', space=sflag, size = 0x4, scoped, tag = 'scoped memory for tpu_custom_call.1']
    #allocation6 [shape = 'u8[65536]{0}', space=vmem, size = 0x10000, scoped, tag = 'input window, operand 3, single buffered']
    #allocation7 [shape = 'u8[65536]{0}', space=vmem, size = 0x10000, scoped, tag = 'input window, operand 5, single buffered']
    #allocation8 [shape = 's32[1]{0}', space=sflag, size = 0x4, scoped, tag = 'scoped memory for tpu_custom_call.1']
    %12 = vsyncpa [#allocation3], 0
    %13 = vsyncpa [#allocation5], 0
    %14 = vsyncpa [#allocation8], 0
    // Predicated region
    $region2: #{tpu_custom_call.1} parent=1 // pred_check
      _
    $region3: #{tpu_custom_call.1} parent=1 // pred_check_branch
      %16 = sbr.rel (0) target = $region5
    $region4: #{tpu_custom_call.1} parent=1 // pred_region
      %s18 = ssub.s32 128, 128
      %19 = vsyncadd [#allocation3], %s18
      %s21 = sshll.u32 [#allocation2], 4
      %s22 = int_to_ptr.vmem [resolvable:$true] %s21
      %24 = dma.hbm_to_vmem [thread:$0]  %s0, 128, %s22, [#allocation3]
    $region5: #{tpu_custom_call.1} parent=1 // pred_fallthru
      _
    // Predicated region
    $region6: #{tpu_custom_call.1} parent=1 // pred_check
      _
    $region7: #{tpu_custom_call.1} parent=1 // pred_check_branch
      %26 = sbr.rel (0) target = $region9
    $region8: #{tpu_custom_call.1} parent=1 // pred_region
      %s28 = ssub.s32 256, 256
      %29 = vsyncadd [#allocation5], %s28
      %s30 = sshll.u32 [#allocation4], 4
      %s31 = int_to_ptr.vmem [resolvable:$true] %s30
      %36 = dma.hbm_to_vmem [thread:$0]  %s1, 256, %s31, [#allocation5], 128, 128, 8
    $region9: #{tpu_custom_call.1} parent=1 // pred_fallthru
      _
    // Predicated region
    $region10: #{tpu_custom_call.1} parent=1 // pred_check
      _
    $region11: #{tpu_custom_call.1} parent=1 // pred_check_branch
      %38 = sbr.rel (0) target = $region13
    $region12: #{tpu_custom_call.1} parent=1 // pred_region
      _
    $region13: #{tpu_custom_call.1} parent=1 // pred_fallthru
      _
    // Predicated region
    $region14: #{tpu_custom_call.1} parent=1 // pred_check
      _
    $region15: #{tpu_custom_call.1} parent=1 // pred_check_branch
      %40 = sbr.rel (0) target = $region17
    $region16: #{tpu_custom_call.1} parent=1 // pred_region
      %s42 = ssub.s32 2048, 2048
      %43 = vsyncadd [#allocation5], %s42
      %s44 = sshll.u32 [#allocation6], 4
      %s45 = int_to_ptr.vmem [resolvable:$true] %s44
      %50 = dma.hbm_to_vmem [thread:$0]  %s3, 2048, %s45, [#allocation5], 128, 128, 8
    $region17: #{tpu_custom_call.1} parent=1 // pred_fallthru
      _
    // Predicated region
    $region18: #{tpu_custom_call.1} parent=1 // pred_check
      _
    $region19: #{tpu_custom_call.1} parent=1 // pred_check_branch
      %52 = sbr.rel (0) target = $region21
    $region20: #{tpu_custom_call.1} parent=1 // pred_region
      _
    $region21: #{tpu_custom_call.1} parent=1 // pred_fallthru
      _
    // Predicated region
    $region22: #{tpu_custom_call.1} parent=1 // pred_check
      _
    $region23: #{tpu_custom_call.1} parent=1 // pred_check_branch
      %54 = sbr.rel (0) target = $region25
    $region24: #{tpu_custom_call.1} parent=1 // pred_region
      %s56 = ssub.s32 2048, 2048
      %57 = vsyncadd [#allocation8], %s56
      %s58 = sshll.u32 [#allocation7], 4
      %s59 = int_to_ptr.vmem [resolvable:$true] %s58
      %64 = dma.hbm_to_vmem [thread:$0]  %s5, 2048, %s59, [#allocation8], 128, 128, 8
    $region25: #{tpu_custom_call.1} parent=1 // pred_fallthru
      _
    // Predicated region
    $region26: #{tpu_custom_call.1} parent=1 // pred_check
      _
    $region27: #{tpu_custom_call.1} parent=1 // pred_check_branch
      %66 = sbr.rel (0) target = $region29
    $region28: #{tpu_custom_call.1} parent=1 // pred_region
      _
    $region29: #{tpu_custom_call.1} parent=1 // pred_fallthru
      _
    // Predicated region
    $region30: #{tpu_custom_call.1} parent=1 // pred_check
      _
    $region31: #{tpu_custom_call.1} parent=1 // pred_check_branch
      %68 = sbr.rel (0) target = $region33
    $region32: #{tpu_custom_call.1} parent=1 // pred_region
      %69 = dma.done [#allocation3], 128
    $region33: #{tpu_custom_call.1} parent=1 // pred_fallthru
      _
    // Predicated region
    $region34: #{tpu_custom_call.1} parent=1 // pred_check
      _
    $region35: #{tpu_custom_call.1} parent=1 // pred_check_branch
      %71 = sbr.rel (0) target = $region37
    $region36: #{tpu_custom_call.1} parent=1 // pred_region
      %72 = dma.done [#allocation5], 256
    $region37: #{tpu_custom_call.1} parent=1 // pred_fallthru
      _
    // Predicated region
    $region38: #{tpu_custom_call.1} parent=1 // pred_check
      _
    $region39: #{tpu_custom_call.1} parent=1 // pred_check_branch
      %74 = sbr.rel (0) target = $region41
    $region40: #{tpu_custom_call.1} parent=1 // pred_region
      %75 = dma.done [#allocation5], 2048
    $region41: #{tpu_custom_call.1} parent=1 // pred_fallthru
      _
    // Predicated region
    $region42: #{tpu_custom_call.1} parent=1 // pred_check
      _
    $region43: #{tpu_custom_call.1} parent=1 // pred_check_branch
      %77 = sbr.rel (0) target = $region45
    $region44: #{tpu_custom_call.1} parent=1 // pred_region
      %78 = dma.done [#allocation8], 2048
    $region45: #{tpu_custom_call.1} parent=1 // pred_fallthru
      _
    %v79 = vld [vmem:[#allocation2] sm:$0xff]
    %v80 = vld [vmem:[#allocation4] sm:$0xff]
    %v81 = vld [vmem:[#allocation4 + $0x8] sm:$0xff]
    %v82 = vld [vmem:[%s2] sm:$0x1]
    %v84 = vlaneseq
    %v85 = vshrl.u32 %v84, 7
    %v86 = vsub.s32 0, %v85
    %v87 = vrot.slane %v82, %v86
    %vm89 = vcmask 130048
    %v91 = vsel %vm89, %v79, 0
    %93 = vmatprep.subr.mxu0 0.0
    %94 = vmatpush1.msra.mxu0 %v80
    %95 = vmatprep.subr.mxu0 0.0
    %96 = vmatpush1.msra.mxu0 %v81
    %97 = vmatprep.subr.mxu0 0.0
    %98 = vmatpush1.msra.mxu0 0.0
    %99 = vmatprep.subr.mxu0 0.0
    %100 = vmatpush1.msra.mxu0 0.0
    %101 = vmatprep.subr.mxu0 0.0
    %102 = vmatpush1.msra.mxu0 0.0
    %103 = vmatprep.subr.mxu0 0.0
    %104 = vmatpush1.msra.mxu0 0.0
    %105 = vmatprep.subr.mxu0 0.0
    %106 = vmatpush1.msra.mxu0 0.0
    %107 = vmatprep.subr.mxu0 0.0
    %108 = vmatpush1.msra.mxu0 0.0
    %109 = vmatprep.subr.mxu0 0.0
    %110 = vmatpush1.msra.mxu0 0.0
    %111 = vmatprep.subr.mxu0 0.0
    %112 = vmatpush1.msra.mxu0 0.0
    %113 = vmatprep.subr.mxu0 0.0
    %114 = vmatpush1.msra.mxu0 0.0
    %115 = vmatprep.subr.mxu0 0.0
    %116 = vmatpush1.msra.mxu0 0.0
    %117 = vmatprep.subr.mxu0 0.0
    %118 = vmatpush1.msra.mxu0 0.0
    %119 = vmatprep.subr.mxu0 0.0
    %120 = vmatpush1.msra.mxu0 0.0
    %121 = vmatprep.subr.mxu0 0.0
    %122 = vmatpush1.msra.mxu0 0.0
    %123 = vmatprep.subr.mxu0 0.0
    %124 = vmatpush1.msra.mxu0 0.0
    %125 = vmatprep.subr.mxu0 0.0
    %126 = vmatpush1.msra.mxu0 0.0
    %127 = vmatprep.subr.mxu0 0.0
    %128 = vmatpush1.msra.mxu0 0.0
    %129 = vmatprep.subr.mxu0 0.0
    %130 = vmatpush1.msra.mxu0 0.0
    %131 = vmatprep.subr.mxu0 0.0
    %132 = vmatpush1.msra.mxu0 0.0
    %133 = vmatprep.subr.mxu0 0.0
    %134 = vmatpush1.msra.mxu0 0.0
    %135 = vmatprep.subr.mxu0 0.0
    %136 = vmatpush1.msra.mxu0 0.0
    %137 = vmatprep.subr.mxu0 0.0
    %138 = vmatpush1.msra.mxu0 0.0
    %139 = vmatprep.subr.mxu0 0.0
    %140 = vmatpush1.msra.mxu0 0.0
    %141 = vmatprep.subr.mxu0 0.0
    %142 = vmatpush1.msra.mxu0 0.0
    %143 = vmatprep.subr.mxu0 0.0
    %144 = vmatpush1.msra.mxu0 0.0
    %145 = vmatprep.subr.mxu0 0.0
    %146 = vmatpush1.msra.mxu0 0.0
    %147 = vmatprep.subr.mxu0 0.0
    %148 = vmatpush1.msra.mxu0 0.0
    %149 = vmatprep.subr.mxu0 0.0
    %150 = vmatpush1.msra.mxu0 0.0
    %151 = vmatprep.subr.mxu0 0.0
    %152 = vmatpush1.msra.mxu0 0.0
    %153 = vmatprep.subr.mxu0 0.0
    %154 = vmatpush1.msra.mxu0 0.0
    %155 = vmatprep.subr.mxu0 0.0
    %156 = vmatpush1.msra.mxu0 0.0
    %157 = vmatprep.mubr.f32.mxu0 0.0
    %158 = vmatmul.mubr.f32.gmra.mrb[0].mxu0 %v91
    %v159 = vpop.f32.mrb[0].mxu0
    %v160 = vadd.f32 %v87, %v159
    %v161 = vpop.f32.mrb[0].mxu0
    %162 = vdwg.mxu0
    %v163 = vmax.f32 %v160, 0.0
    %v164 = vld [vmem:[#allocation6] sm:$0xff]
    %v165 = vld [vmem:[#allocation6 + $0x8] sm:$0xff]
    %v166 = vld [vmem:[#allocation6 + $0x10] sm:$0xff]
    %v167 = vld [vmem:[#allocation6 + $0x18] sm:$0xff]
    %v168 = vld [vmem:[#allocation6 + $0x20] sm:$0xff]
    %v169 = vld [vmem:[#allocation6 + $0x28] sm:$0xff]
    %v170 = vld [vmem:[#allocation6 + $0x30] sm:$0xff]
    %v171 = vld [vmem:[#allocation6 + $0x38] sm:$0xff]
    %v172 = vld [vmem:[#allocation6 + $0x40] sm:$0xff]
    %v173 = vld [vmem:[#allocation6 + $0x48] sm:$0xff]
    %v174 = vld [vmem:[#allocation6 + $0x50] sm:$0xff]
    %v175 = vld [vmem:[#allocation6 + $0x58] sm:$0xff]
    %v176 = vld [vmem:[#allocation6 + $0x60] sm:$0xff]
    %v177 = vld [vmem:[#allocation6 + $0x68] sm:$0xff]
    %v178 = vld [vmem:[#allocation6 + $0x70] sm:$0xff]
    %v179 = vld [vmem:[#allocation6 + $0x78] sm:$0xff]
    %v180 = vld [vmem:[%s4] sm:$0x1]
    %v182 = vlaneseq
    %v183 = vshrl.u32 %v182, 7
    %v184 = vsub.s32 0, %v183
    %v185 = vrot.slane %v180, %v184
    %187 = vmatprep.subr.mxu0 0.0
    %188 = vmatpush1.msra.mxu0 %v164
    %189 = vmatprep.subr.mxu0 0.0
    %190 = vmatpush1.msra.mxu0 %v165
    %191 = vmatprep.subr.mxu0 0.0
    %192 = vmatpush1.msra.mxu0 %v166
    %193 = vmatprep.subr.mxu0 0.0
    %194 = vmatpush1.msra.mxu0 %v167
    %195 = vmatprep.subr.mxu0 0.0
    %196 = vmatpush1.msra.mxu0 %v168
    %197 = vmatprep.subr.mxu0 0.0
    %198 = vmatpush1.msra.mxu0 %v169
    %199 = vmatprep.subr.mxu0 0.0
    %200 = vmatpush1.msra.mxu0 %v170
    %201 = vmatprep.subr.mxu0 0.0
    %202 = vmatpush1.msra.mxu0 %v171
    %203 = vmatprep.subr.mxu0 0.0
    %204 = vmatpush1.msra.mxu0 %v172
    %205 = vmatprep.subr.mxu0 0.0
    %206 = vmatpush1.msra.mxu0 %v173
    %207 = vmatprep.subr.mxu0 0.0
    %208 = vmatpush1.msra.mxu0 %v174
    %209 = vmatprep.subr.mxu0 0.0
    %210 = vmatpush1.msra.mxu0 %v175
    %211 = vmatprep.subr.mxu0 0.0
    %212 = vmatpush1.msra.mxu0 %v176
    %213 = vmatprep.subr.mxu0 0.0
    %214 = vmatpush1.msra.mxu0 %v177
    %215 = vmatprep.subr.mxu0 0.0
    %216 = vmatpush1.msra.mxu0 %v178
    %217 = vmatprep.subr.mxu0 0.0
    %218 = vmatpush1.msra.mxu0 %v179
    %219 = vmatprep.subr.mxu0 0.0
    %220 = vmatpush1.msra.mxu0 0.0
    %221 = vmatprep.subr.mxu0 0.0
    %222 = vmatpush1.msra.mxu0 0.0
    %223 = vmatprep.subr.mxu0 0.0
    %224 = vmatpush1.msra.mxu0 0.0
    %225 = vmatprep.subr.mxu0 0.0
    %226 = vmatpush1.msra.mxu0 0.0
    %227 = vmatprep.subr.mxu0 0.0
    %228 = vmatpush1.msra.mxu0 0.0
    %229 = vmatprep.subr.mxu0 0.0
    %230 = vmatpush1.msra.mxu0 0.0
    %231 = vmatprep.subr.mxu0 0.0
    %232 = vmatpush1.msra.mxu0 0.0
    %233 = vmatprep.subr.mxu0 0.0
    %234 = vmatpush1.msra.mxu0 0.0
    %235 = vmatprep.subr.mxu0 0.0
    %236 = vmatpush1.msra.mxu0 0.0
    %237 = vmatprep.subr.mxu0 0.0
    %238 = vmatpush1.msra.mxu0 0.0
    %239 = vmatprep.subr.mxu0 0.0
    %240 = vmatpush1.msra.mxu0 0.0
    %241 = vmatprep.subr.mxu0 0.0
    %242 = vmatpush1.msra.mxu0 0.0
    %243 = vmatprep.subr.mxu0 0.0
    %244 = vmatpush1.msra.mxu0 0.0
    %245 = vmatprep.subr.mxu0 0.0
    %246 = vmatpush1.msra.mxu0 0.0
    %247 = vmatprep.subr.mxu0 0.0
    %248 = vmatpush1.msra.mxu0 0.0
    %249 = vmatprep.subr.mxu0 0.0
    %250 = vmatpush1.msra.mxu0 0.0
    %251 = vmatprep.mubr.f32.mxu0 0.0
    %252 = vmatmul.mubr.f32.gmra.mrb[0].mxu0 %v163
    %v253 = vpop.f32.mrb[0].mxu0
    %v254 = vadd.f32 %v185, %v253
    %v255 = vpop.f32.mrb[0].mxu0
    %256 = vdwg.mxu0
    %v257 = vmax.f32 %v254, 0.0
    %v258 = vld [vmem:[#allocation7] sm:$0xff]
    %v259 = vld [vmem:[#allocation7 + $0x8] sm:$0xff]
    %v260 = vld [vmem:[#allocation7 + $0x10] sm:$0xff]
    %v261 = vld [vmem:[#allocation7 + $0x18] sm:$0xff]
    %v262 = vld [vmem:[#allocation7 + $0x20] sm:$0xff]
    %v263 = vld [vmem:[#allocation7 + $0x28] sm:$0xff]
    %v264 = vld [vmem:[#allocation7 + $0x30] sm:$0xff]
    %v265 = vld [vmem:[#allocation7 + $0x38] sm:$0xff]
    %v266 = vld [vmem:[#allocation7 + $0x40] sm:$0xff]
    %v267 = vld [vmem:[#allocation7 + $0x48] sm:$0xff]
    %v268 = vld [vmem:[#allocation7 + $0x50] sm:$0xff]
    %v269 = vld [vmem:[#allocation7 + $0x58] sm:$0xff]
    %v270 = vld [vmem:[#allocation7 + $0x60] sm:$0xff]
    %v271 = vld [vmem:[#allocation7 + $0x68] sm:$0xff]
    %v272 = vld [vmem:[#allocation7 + $0x70] sm:$0xff]
    %v273 = vld [vmem:[#allocation7 + $0x78] sm:$0xff]
    %v274 = vld [vmem:[%s6] sm:$0x1]
    %v276 = vlaneseq
    %v277 = vshrl.u32 %v276, 7
    %v278 = vsub.s32 0, %v277
    %v279 = vrot.slane %v274, %v278
    %281 = vmatprep.subr.mxu0 0.0
    %282 = vmatpush1.msra.mxu0 %v258
    %283 = vmatprep.subr.mxu0 0.0
    %284 = vmatpush1.msra.mxu0 %v259
    %285 = vmatprep.subr.mxu0 0.0
    %286 = vmatpush1.msra.mxu0 %v260
    %287 = vmatprep.subr.mxu0 0.0
    %288 = vmatpush1.msra.mxu0 %v261
    %289 = vmatprep.subr.mxu0 0.0
    %290 = vmatpush1.msra.mxu0 %v262
    %291 = vmatprep.subr.mxu0 0.0
    %292 = vmatpush1.msra.mxu0 %v263
    %293 = vmatprep.subr.mxu0 0.0
    %294 = vmatpush1.msra.mxu0 %v264
    %295 = vmatprep.subr.mxu0 0.0
    %296 = vmatpush1.msra.mxu0 %v265
    %297 = vmatprep.subr.mxu0 0.0
    %298 = vmatpush1.msra.mxu0 %v266
    %299 = vmatprep.subr.mxu0 0.0
    %300 = vmatpush1.msra.mxu0 %v267
    %301 = vmatprep.subr.mxu0 0.0
    %302 = vmatpush1.msra.mxu0 %v268
    %303 = vmatprep.subr.mxu0 0.0
    %304 = vmatpush1.msra.mxu0 %v269
    %305 = vmatprep.subr.mxu0 0.0
    %306 = vmatpush1.msra.mxu0 %v270
    %307 = vmatprep.subr.mxu0 0.0
    %308 = vmatpush1.msra.mxu0 %v271
    %309 = vmatprep.subr.mxu0 0.0
    %310 = vmatpush1.msra.mxu0 %v272
    %311 = vmatprep.subr.mxu0 0.0
    %312 = vmatpush1.msra.mxu0 %v273
    %313 = vmatprep.subr.mxu0 0.0
    %314 = vmatpush1.msra.mxu0 0.0
    %315 = vmatprep.subr.mxu0 0.0
    %316 = vmatpush1.msra.mxu0 0.0
    %317 = vmatprep.subr.mxu0 0.0
    %318 = vmatpush1.msra.mxu0 0.0
    %319 = vmatprep.subr.mxu0 0.0
    %320 = vmatpush1.msra.mxu0 0.0
    %321 = vmatprep.subr.mxu0 0.0
    %322 = vmatpush1.msra.mxu0 0.0
    %323 = vmatprep.subr.mxu0 0.0
    %324 = vmatpush1.msra.mxu0 0.0
    %325 = vmatprep.subr.mxu0 0.0
    %326 = vmatpush1.msra.mxu0 0.0
    %327 = vmatprep.subr.mxu0 0.0
    %328 = vmatpush1.msra.mxu0 0.0
    %329 = vmatprep.subr.mxu0 0.0
    %330 = vmatpush1.msra.mxu0 0.0
    %331 = vmatprep.subr.mxu0 0.0
    %332 = vmatpush1.msra.mxu0 0.0
    %333 = vmatprep.subr.mxu0 0.0
    %334 = vmatpush1.msra.mxu0 0.0
    %335 = vmatprep.subr.mxu0 0.0
    %336 = vmatpush1.msra.mxu0 0.0
    %337 = vmatprep.subr.mxu0 0.0
    %338 = vmatpush1.msra.mxu0 0.0
    %339 = vmatprep.subr.mxu0 0.0
    %340 = vmatpush1.msra.mxu0 0.0
    %341 = vmatprep.subr.mxu0 0.0
    %342 = vmatpush1.msra.mxu0 0.0
    %343 = vmatprep.subr.mxu0 0.0
    %344 = vmatpush1.msra.mxu0 0.0
    %345 = vmatprep.mubr.f32.mxu0 0.0
    %346 = vmatmul.mubr.f32.gmra.mrb[0].mxu0 %v257
    %v347 = vpop.f32.mrb[0].mxu0
    %v348 = vadd.f32 %v279, %v347
    %v349 = vpop.f32.mrb[0].mxu0
    %350 = vdwg.mxu0
    %351 = vmax.xlane.f32.xlu0 %v348
    %v352 = vpop.xlane.xlu0 %351
    %v353 = vsub.f32 %v348, %v352
    %v354 = vmul.f32 %v353, 1.442695
    %v355 = vpow.pop %v354
    %356 = vadd.xlane.f32.xlu0 %v355
    %v357 = vpop.xlane.xlu0 %356
    %v358 = vrcp.pop %v357
    %v359 = vmul.f32 %v355, %v358
    %vm360 = vcmask 23552
    %361 = vst.msk [vmem:[%s7] sm:$0xff] %vm360, %v359
    // Predicated region
    $region46: #{tpu_custom_call.1} parent=1 // pred_check
      _
    $region47: #{tpu_custom_call.1} parent=1 // pred_check_branch
      %363 = sbr.rel (0) target = $region49
    $region48: #{tpu_custom_call.1} parent=1 // pred_region
      _
    $region49: #{tpu_custom_call.1} parent=1 // pred_fallthru
      _
    // Predicated region
    $region50: #{tpu_custom_call.1} parent=1 // pred_check
      _
    $region51: #{tpu_custom_call.1} parent=1 // pred_check_branch
      %365 = sbr.rel (0) target = $region53
    $region52: #{tpu_custom_call.1} parent=1 // pred_region
      _
    $region53: #{tpu_custom_call.1} parent=1 // pred_fallthru
      _
    %366 = vsyncpa [#allocation3], 1
    %367 = vsyncpa [#allocation5], 1
    %368 = vsyncpa [#allocation8], 1

</llo_original>
